<compile_context>
chip_gen: v6e
topology: v6e:2x2x1
jax: 0.10.0
libtpu: 0.0.40
codegen_flags: <defaults>
</compile_context>

<pallas_src>
import functools
import math

import jax
import jax.numpy as jnp
from jax.experimental import pallas as pl
from jax.experimental.pallas import tpu as pltpu


def _round_up(x, m):
    return ((x + m - 1) // m) * m


def _make_fused_mlp_kernel(output_size, with_argmax):
    """Fused MLP on one batch tile.

    x tile:   [TILE_N, IN_P]   bf16 (or f32 fallback, cast in-register)
    weights:  [*, *]           bf16 (VMEM-resident across grid steps, 128-padded)
    biases:   [1, *]           f32
    q out:    [TILE_N, OUT_P]  bf16 (lane-dense, unmasked stores)
    action:   [TILE_N, 1]      i32  (only when with_argmax)
    """

    def kernel(x_ref, w1_ref, b1_ref, w2_ref, b2_ref, w3_ref, b3_ref,
               q_ref, *a_refs):
        x = x_ref[...]
        if x.dtype != jnp.bfloat16:           # fallback: input arrived f32 (no pad path)
            x = x.astype(jnp.bfloat16)
        h = jnp.dot(x, w1_ref[...], preferred_element_type=jnp.float32) + b1_ref[...]
        h = jnp.maximum(h, 0.0).astype(jnp.bfloat16)
        h = jnp.dot(h, w2_ref[...], preferred_element_type=jnp.float32) + b2_ref[...]
        h = jnp.maximum(h, 0.0).astype(jnp.bfloat16)
        q = jnp.dot(h, w3_ref[...], preferred_element_type=jnp.float32) + b3_ref[...]
        q_ref[...] = q.astype(q_ref.dtype)

        if with_argmax:
            a_ref = a_refs[0]
            out_p = q.shape[-1]
            col = jax.lax.broadcasted_iota(jnp.int32, q.shape, 1)
            valid = col < output_size
            qm = jnp.where(valid, q, -jnp.inf)        # mask padded (zero) columns
            m = jnp.max(qm, axis=-1, keepdims=True)
            # first (lowest-index) maximal column, matching torch/jnp argmax.
            hit = jnp.where((qm >= m) & valid, col.astype(jnp.float32),
                            jnp.float32(out_p))
            a_ref[...] = jnp.min(hit, axis=-1, keepdims=True).astype(jnp.int32)

    return kernel


@functools.partial(jax.jit, static_argnames=("output_size", "with_argmax"))
def _run_mlp_head(obs2d, params_padded, output_size, with_argmax=False):
    """obs2d: [N, input_size] f32 -> q [N, output_size] f32 (+ argmax actions)."""
    w1, b1, w2, b2, w3, b3 = params_padded
    n, f = obs2d.shape
    in_p, h0_p = w1.shape
    h1_p = w2.shape[1]
    out_p = w3.shape[1]

    # Feature pad + cast to bf16 fused into ONE op (halves the per-tile x DMA vs
    # f32).  When the feature dim is already lane-dense (multiple of 128) we skip
    # the pre-kernel copy entirely and let the kernel cast in registers.
    if in_p != f:
        x = jnp.pad(obs2d.astype(jnp.bfloat16), ((0, 0), (0, in_p - f)))
    else:
        x = obs2d

    # Batch tile: multiple of 128 rows; >= 2 grid steps whenever n > 128 so the
    # "parallel" axis actually shards across both v7x TensorCores; capped so the
    # double-buffered x/q tiles stay far below every generation's scoped VMEM
    # (footprint ~1-2 MiB at these widths -> no vmem_limit_bytes needed).
    half = _round_up(max(1, (n + 1) // 2), 128)
    tile_n = min(1024 if n >= 8192 else 512, half)
    # No explicit row padding: Pallas masks the remainder block.  Garbage rows in
    # the masked block only feed masked-off output rows (no cross-row mixing).
    grid = (pl.cdiv(n, tile_n),)

    out_shape = [jax.ShapeDtypeStruct((n, out_p), jnp.bfloat16)]
    out_specs = [pl.BlockSpec((tile_n, out_p), lambda i: (i, 0))]
    if with_argmax:
        out_shape.append(jax.ShapeDtypeStruct((n, 1), jnp.int32))
        out_specs.append(pl.BlockSpec((tile_n, 1), lambda i: (i, 0)))

    flops = 2 * n * (in_p * h0_p + h0_p * h1_p + h1_p * out_p)
    bytes_accessed = (
        n * in_p * x.dtype.itemsize
        + sum(int(a.size) * a.dtype.itemsize for a in (w1, b1, w2, b2, w3, b3))
        + n * out_p * 2
        + (n * 4 if with_argmax else 0)
    )

    outs = pl.pallas_call(
        _make_fused_mlp_kernel(output_size, with_argmax),
        out_shape=out_shape,
        grid=grid,
        in_specs=[
            # obs: one tile per grid step -> double-buffered HBM->VMEM DMA overlaps
            # with the previous tile's matmuls.
            pl.BlockSpec((tile_n, in_p), lambda i: (i, 0)),
            # weights / biases: constant block index -> fetched once, VMEM-resident.
            # NOTE: default double-buffering costs <0.2 MiB total here; switch to
            # pipeline_mode=pl.Buffered(1) if hidden sizes grow to multi-MiB.
            pl.BlockSpec((in_p, h0_p), lambda i: (0, 0)),
            pl.BlockSpec((1, h0_p), lambda i: (0, 0)),
            pl.BlockSpec((h0_p, h1_p), lambda i: (0, 0)),
            pl.BlockSpec((1, h1_p), lambda i: (0, 0)),
            pl.BlockSpec((h1_p, out_p), lambda i: (0, 0)),
            pl.BlockSpec((1, out_p), lambda i: (0, 0)),
        ],
        out_specs=out_specs,
        compiler_params=pltpu.CompilerParams(
            # Batch axis is independent per tile -> megacore-shard on v7x.
            dimension_semantics=("parallel",),
        ),
        cost_estimate=pl.CostEstimate(
            flops=flops, transcendentals=0, bytes_accessed=bytes_accessed
        ),
    )(x, w1, b1, w2, b2, w3, b3)

    # Slice off padded columns; return f32 externally (precision already bf16-limited
    # by the bf16 matmul operands, so this is a free dtype restoration).
    q = outs[0][:, :output_size].astype(jnp.float32)
    if with_argmax:
        return q, outs[1][:, 0]
    return q


class MyMlpDQNModelPallas:
    """JAX/Pallas re-implementation of MyMlpDQNModel (non-dueling path).

    head = MlpModel(input_size, hidden_sizes, output_size, ReLU):
        Linear(input, h0) -> ReLU -> Linear(h0, h1) -> ReLU -> Linear(h1, output)
    """

    # TODO(synk): dueling=True branch (DuelingHeadModel) is not implemented.

    def __init__(self, input_size, hidden_sizes, output_size, key,
                 weight_dtype=jnp.bfloat16):
        assert len(hidden_sizes) == 2, "this build fuses exactly two hidden layers"
        self.input_size = input_size
        self.hidden_sizes = list(hidden_sizes)
        self.output_size = output_size

        h0, h1 = hidden_sizes
        # Lane-dense padded feature widths (multiples of 128 — kept at 128, not 256).
        in_p = _round_up(input_size, 128)
        h0_p = _round_up(h0, 128)
        h1_p = _round_up(h1, 128)
        out_p = _round_up(output_size, 128)

        k1, k2, k3, k4, k5, k6 = jax.random.split(key, 6)

        def init_linear(kw, kb, fan_in, fan_out, fan_in_p, fan_out_p):
            # PyTorch Linear default-style uniform init; weights pre-transposed to
            # [in, out] so the kernel computes x @ W + b (== torch's x @ W.T + b).
            bound = 1.0 / math.sqrt(fan_in)
            w = jax.random.uniform(kw, (fan_in, fan_out), jnp.float32, -bound, bound)
            b = jax.random.uniform(kb, (fan_out,), jnp.float32, -bound, bound)
            w_p = (jnp.zeros((fan_in_p, fan_out_p), weight_dtype)
                   .at[:fan_in, :fan_out].set(w.astype(weight_dtype)))
            b_p = jnp.zeros((1, fan_out_p), jnp.float32).at[0, :fan_out].set(b)
            return (w, b.reshape(1, fan_out)), (w_p, b_p)

        (w1, b1), (w1p, b1p) = init_linear(k1, k2, input_size, h0, in_p, h0_p)
        (w2, b2), (w2p, b2p) = init_linear(k3, k4, h0, h1, h0_p, h1_p)
        (w3, b3), (w3p, b3p) = init_linear(k5, k6, h1, output_size, h1_p, out_p)

        # Unpadded f32 params (reference / inspection) and padded kernel params.
        self.params_f32 = (w1, b1, w2, b2, w3, b3)
        self.params_padded = (w1p, b1p, w2p, b2p, w3p, b3p)

    @staticmethod
    def _leading_dims(obs):
        # infer_leading_dims(obs, 1): one trailing obs dim; leading () / (B,) / (T, B).
        lead_shape = obs.shape[:-1]
        lead_dim = len(lead_shape)
        assert lead_dim <= 2, "at most (T, B) leading dims supported"
        if lead_dim == 2:
            T, B = lead_shape
        elif lead_dim == 1:
            T, B = 1, lead_shape[0]
        else:
            T, B = 1, 1
        return lead_shape, T, B

    def forward(self, observation, prev_action=None, prev_reward=None):
        obs = jnp.asarray(observation, dtype=jnp.float32)
        lead_shape, T, B = self._leading_dims(obs)
        obs2d = obs.reshape(T * B, obs.shape[-1])
        q = _run_mlp_head(obs2d, self.params_padded, self.output_size)
        return q.reshape(lead_shape + (self.output_size,))  # restore_leading_dims

    def predict(self, observations):
        obs = jnp.asarray(observations, dtype=jnp.float32)
        lead_shape, T, B = self._leading_dims(obs)
        obs2d = obs.reshape(T * B, obs.shape[-1])
        q2d, a1d = _run_mlp_head(obs2d, self.params_padded, self.output_size,
                                 with_argmax=True)
        q = q2d.reshape(lead_shape + (self.output_size,))
        actions = a1d.reshape(lead_shape)
        # TODO(synk): torch returns a python scalar (.item()) / numpy; we keep JAX arrays.
        return {"action": actions, "q": q}


def _reference_forward(obs, params_f32):
    """Plain-JAX f32 reference of the same MLP."""
    w1, b1, w2, b2, w3, b3 = params_f32
    x = jnp.asarray(obs, jnp.float32)
    lead = x.shape[:-1]
    x = x.reshape(-1, x.shape[-1])
    h = jnp.maximum(x @ w1 + b1, 0.0)
    h = jnp.maximum(h @ w2 + b2, 0.0)
    q = h @ w3 + b3
    return q.reshape(lead + (w3.shape[1],))


if __name__ == "__main__":
    key = jax.random.PRNGKey(0)
    k_model, k_obs, k_obs2 = jax.random.split(key, 3)

    input_size = 16
    hidden_sizes = [32, 32]
    output_size = 8
    B = 4  # single leading batch dim (lead_dim == 1)

    model = MyMlpDQNModelPallas(input_size, hidden_sizes, output_size, k_model)

    observation = jax.random.normal(k_obs, (B, input_size), dtype=jnp.float32)

    q = jax.block_until_ready(model.forward(observation))
    q_ref = _reference_forward(observation, model.params_f32)
    assert q.shape == (B, output_size)
    # bf16 weights/activations/output store in the kernel -> tolerate small rounding.
    assert jnp.allclose(q, q_ref, atol=2e-2, rtol=2e-2), "mismatch vs reference"

    out = model.predict(observation)
    jax.block_until_ready(out["q"])
    assert out["action"].shape == (B,)
    assert bool(jnp.all((out["action"] >= 0) & (out["action"] < output_size)))
    assert jnp.allclose(out["q"], q_ref, atol=2e-2, rtol=2e-2), "predict q mismatch"

    # (T, B, input) leading-dim case
    obs_tb = jax.random.normal(k_obs2, (3, B, input_size), dtype=jnp.float32)
    q_tb = jax.block_until_ready(model.forward(obs_tb))
    assert q_tb.shape == (3, B, output_size)
    q_tb_ref = _reference_forward(obs_tb, model.params_f32)
    assert jnp.allclose(q_tb, q_tb_ref, atol=2e-2, rtol=2e-2), "TB mismatch vs reference"

    out_tb = model.predict(obs_tb)
    jax.block_until_ready(out_tb["q"])
    assert out_tb["action"].shape == (3, B)

    print("KERNEL_OK")
</pallas_src>

<mosaic_0001>
module attributes {stable_mosaic.version = 11 : i64} {
  func.func @kernel(%arg0: i32, %arg1: memref<128x128xbf16, #tpu.memory_space<vmem>>, %arg2: memref<128x128xbf16, #tpu.memory_space<vmem>>, %arg3: memref<1x128xf32, #tpu.memory_space<vmem>>, %arg4: memref<128x128xbf16, #tpu.memory_space<vmem>>, %arg5: memref<1x128xf32, #tpu.memory_space<vmem>>, %arg6: memref<128x128xbf16, #tpu.memory_space<vmem>>, %arg7: memref<1x128xf32, #tpu.memory_space<vmem>>, %arg8: memref<128x128xbf16, #tpu.memory_space<vmem>>) attributes {dimension_semantics = [#tpu.dimension_semantics<parallel>], iteration_bounds = array<i64: 1>, scalar_prefetch = 0 : i64, scratch_operands = 0 : i64, tpu.core_type = #tpu.core_type<tc>, window_params = [{transform_indices = @transform_0, window_bounds = array<i64: 128, 128>}, {pipeline_mode = #tpu.pipeline_mode<synchronous>, transform_indices = @transform_1, window_bounds = array<i64: 128, 128>}, {pipeline_mode = #tpu.pipeline_mode<synchronous>, transform_indices = @transform_2, window_bounds = array<i64: 1, 128>}, {pipeline_mode = #tpu.pipeline_mode<synchronous>, transform_indices = @transform_3, window_bounds = array<i64: 128, 128>}, {pipeline_mode = #tpu.pipeline_mode<synchronous>, transform_indices = @transform_4, window_bounds = array<i64: 1, 128>}, {pipeline_mode = #tpu.pipeline_mode<synchronous>, transform_indices = @transform_5, window_bounds = array<i64: 128, 128>}, {pipeline_mode = #tpu.pipeline_mode<synchronous>, transform_indices = @transform_6, window_bounds = array<i64: 1, 128>}, {transform_indices = @transform_7, window_bounds = array<i64: 128, 128>}]} {
    %c0 = arith.constant 0 : index
    %c0_0 = arith.constant 0 : index
    %0 = vector.load %arg1[%c0, %c0_0] : memref<128x128xbf16, #tpu.memory_space<vmem>>, vector<128x128xbf16>
    %c0_1 = arith.constant 0 : index
    %c0_2 = arith.constant 0 : index
    %1 = vector.load %arg2[%c0_1, %c0_2] : memref<128x128xbf16, #tpu.memory_space<vmem>>, vector<128x128xbf16>
    %cst = arith.constant dense<0.000000e+00> : vector<128x128xf32>
    %2 = tpu.matmul %0, %1, %cst {dimension_numbers = #tpu.dot_dimension_numbers<[1], [0], [0], [1], [0, 0, 1, 1], [], []>} : vector<128x128xbf16>, vector<128x128xbf16>, vector<128x128xf32> -> vector<128x128xf32>
    %c0_3 = arith.constant 0 : index
    %c0_4 = arith.constant 0 : index
    %3 = vector.load %arg3[%c0_3, %c0_4] : memref<1x128xf32, #tpu.memory_space<vmem>>, vector<1x128xf32>
    %4 = vector.broadcast %3 : vector<1x128xf32> to vector<128x128xf32>
    %5 = arith.addf %2, %4 : vector<128x128xf32>
    %cst_5 = arith.constant 0.000000e+00 : f32
    %6 = vector.broadcast %cst_5 : f32 to vector<128x128xf32>
    %7 = arith.maximumf %5, %6 : vector<128x128xf32>
    %8 = arith.truncf %7 : vector<128x128xf32> to vector<128x128xbf16>
    %c0_6 = arith.constant 0 : index
    %c0_7 = arith.constant 0 : index
    %9 = vector.load %arg4[%c0_6, %c0_7] : memref<128x128xbf16, #tpu.memory_space<vmem>>, vector<128x128xbf16>
    %cst_8 = arith.constant dense<0.000000e+00> : vector<128x128xf32>
    %10 = tpu.matmul %8, %9, %cst_8 {dimension_numbers = #tpu.dot_dimension_numbers<[1], [0], [0], [1], [0, 0, 1, 1], [], []>} : vector<128x128xbf16>, vector<128x128xbf16>, vector<128x128xf32> -> vector<128x128xf32>
    %c0_9 = arith.constant 0 : index
    %c0_10 = arith.constant 0 : index
    %11 = vector.load %arg5[%c0_9, %c0_10] : memref<1x128xf32, #tpu.memory_space<vmem>>, vector<1x128xf32>
    %12 = vector.broadcast %11 : vector<1x128xf32> to vector<128x128xf32>
    %13 = arith.addf %10, %12 : vector<128x128xf32>
    %cst_11 = arith.constant 0.000000e+00 : f32
    %14 = vector.broadcast %cst_11 : f32 to vector<128x128xf32>
    %15 = arith.maximumf %13, %14 : vector<128x128xf32>
    %16 = arith.truncf %15 : vector<128x128xf32> to vector<128x128xbf16>
    %c0_12 = arith.constant 0 : index
    %c0_13 = arith.constant 0 : index
    %17 = vector.load %arg6[%c0_12, %c0_13] : memref<128x128xbf16, #tpu.memory_space<vmem>>, vector<128x128xbf16>
    %cst_14 = arith.constant dense<0.000000e+00> : vector<128x128xf32>
    %18 = tpu.matmul %16, %17, %cst_14 {dimension_numbers = #tpu.dot_dimension_numbers<[1], [0], [0], [1], [0, 0, 1, 1], [], []>} : vector<128x128xbf16>, vector<128x128xbf16>, vector<128x128xf32> -> vector<128x128xf32>
    %c0_15 = arith.constant 0 : index
    %c0_16 = arith.constant 0 : index
    %19 = vector.load %arg7[%c0_15, %c0_16] : memref<1x128xf32, #tpu.memory_space<vmem>>, vector<1x128xf32>
    %20 = vector.broadcast %19 : vector<1x128xf32> to vector<128x128xf32>
    %21 = arith.addf %18, %20 : vector<128x128xf32>
    %22 = arith.truncf %21 : vector<128x128xf32> to vector<128x128xbf16>
    %c0_17 = arith.constant 0 : index
    %c0_18 = arith.constant 0 : index
    %23 = vector.load %arg8[%c0_17, %c0_18] : memref<128x128xbf16, #tpu.memory_space<vmem>>, vector<128x128xbf16>
    tpu.vector_store %arg8[%c0_17, %c0_18], %22 {strides = array<i32>} : memref<128x128xbf16, #tpu.memory_space<vmem>>, vector<128x128xbf16>,
    return
  }
  func.func @transform_0(%arg0: i32) -> (i32, i32) {
    %c0_i32 = arith.constant 0 : i32
    %c0_i32_0 = arith.constant 0 : i32
    return %arg0, %c0_i32 : i32, i32
  }
  func.func @transform_1(%arg0: i32) -> (i32, i32) {
    %c0_i32 = arith.constant 0 : i32
    %c0_i32_0 = arith.constant 0 : i32
    %c0_i32_1 = arith.constant 0 : i32
    return %c0_i32, %c0_i32_0 : i32, i32
  }
  func.func @transform_2(%arg0: i32) -> (i32, i32) {
    %c0_i32 = arith.constant 0 : i32
    %c0_i32_0 = arith.constant 0 : i32
    %c0_i32_1 = arith.constant 0 : i32
    return %c0_i32, %c0_i32_0 : i32, i32
  }
  func.func @transform_3(%arg0: i32) -> (i32, i32) {
    %c0_i32 = arith.constant 0 : i32
    %c0_i32_0 = arith.constant 0 : i32
    %c0_i32_1 = arith.constant 0 : i32
    return %c0_i32, %c0_i32_0 : i32, i32
  }
  func.func @transform_4(%arg0: i32) -> (i32, i32) {
    %c0_i32 = arith.constant 0 : i32
    %c0_i32_0 = arith.constant 0 : i32
    %c0_i32_1 = arith.constant 0 : i32
    return %c0_i32, %c0_i32_0 : i32, i32
  }
  func.func @transform_5(%arg0: i32) -> (i32, i32) {
    %c0_i32 = arith.constant 0 : i32
    %c0_i32_0 = arith.constant 0 : i32
    %c0_i32_1 = arith.constant 0 : i32
    return %c0_i32, %c0_i32_0 : i32, i32
  }
  func.func @transform_6(%arg0: i32) -> (i32, i32) {
    %c0_i32 = arith.constant 0 : i32
    %c0_i32_0 = arith.constant 0 : i32
    %c0_i32_1 = arith.constant 0 : i32
    return %c0_i32, %c0_i32_0 : i32, i32
  }
  func.func @transform_7(%arg0: i32) -> (i32, i32) {
    %c0_i32 = arith.constant 0 : i32
    %c0_i32_0 = arith.constant 0 : i32
    return %arg0, %c0_i32 : i32, i32
  }
}

</mosaic_0001>

<llo_original>
// kernel: _run_mlp_head.1
$region0: #{_run_mlp_head.1}
  #allocation0 [shape = 'u32[]', space=smem, size = 0x4, offset = 0x4, fixed_abs, tag = 'smem constant byte address 0x4 - core index']
  #allocation1 [shape = 'u32[144,128]{1,0:T(1,128)}', space=vmem, size = 0x12000, scoped, tag = 'internal scratch']
  %s0 = inlined_call_operand.vmem [shape: bf16[4,128], index: 0, kind: input, shape index: {}]
  %s1 = inlined_call_operand.hbm [shape: bf16[128,128], index: 1, kind: input, shape index: {}]
  %s2 = inlined_call_operand.vmem [shape: f32[1,128], index: 2, kind: input, shape index: {}]
  %s3 = inlined_call_operand.hbm [shape: bf16[128,128], index: 3, kind: input, shape index: {}]
  %s4 = inlined_call_operand.vmem [shape: f32[1,128], index: 4, kind: input, shape index: {}]
  %s5 = inlined_call_operand.hbm [shape: bf16[128,128], index: 5, kind: input, shape index: {}]
  %s6 = inlined_call_operand.vmem [shape: f32[1,128], index: 6, kind: input, shape index: {}]
  %s7 = inlined_call_operand.vmem [shape: bf16[4,128], index: 7, kind: output, shape index: {}]
  %s8 = sld [smem:[#allocation0]]
  $region80: #{_run_mlp_head.1} parent=0
    _
  %s10 = ssub.s32 1, %s8
  %s11 = scalar_select 0, %s10, %s8
  $region1: #{_run_mlp_head.1} parent=0
    #allocation2 [shape = 'u8[32768]{0}', space=vmem, size = 0x8000, scoped, tag = 'input window, operand 1, single buffered']
    #allocation3 [shape = 's32[1]{0}', space=sflag, size = 0x4, scoped, tag = 'scoped memory for _run_mlp_head.1']
    #allocation4 [shape = 'u8[32768]{0}', space=vmem, size = 0x8000, scoped, tag = 'input window, operand 3, single buffered']
    #allocation5 [shape = 's32[1]{0}', space=sflag, size = 0x4, scoped, tag = 'scoped memory for _run_mlp_head.1']
    #allocation6 [shape = 'u8[32768]{0}', space=vmem, size = 0x8000, scoped, tag = 'input window, operand 5, single buffered']
    #allocation7 [shape = 'u8[32768]{0}', space=vmem, size = 0x8000, scoped, tag = 'output window, operand 0, single buffered']
    %12 = vsyncpa [#allocation3], 0
    %13 = vsyncpa [#allocation5], 0
    // Predicated region
    $region2: #{_run_mlp_head.1} parent=1 // pred_check
      _
    $region3: #{_run_mlp_head.1} parent=1 // pred_check_branch
      %15 = sbr.rel (0) target = $region5
    $region4: #{_run_mlp_head.1} parent=1 // pred_region
      _
    $region5: #{_run_mlp_head.1} parent=1 // pred_fallthru
      _
    // Predicated region
    $region6: #{_run_mlp_head.1} parent=1 // pred_check
      _
    $region7: #{_run_mlp_head.1} parent=1 // pred_check_branch
      %17 = sbr.rel (0) target = $region9
    $region8: #{_run_mlp_head.1} parent=1 // pred_region
      %s19 = ssub.s32 1024, 1024
      %20 = vsyncadd [#allocation3], %s19
      %s21 = sshll.u32 [#allocation2], 4
      %s22 = int_to_ptr.vmem [resolvable:$true] %s21
      %27 = dma.hbm_to_vmem [thread:$0]  %s1, 1024, %s22, [#allocation3], 64, 64, 4
    $region9: #{_run_mlp_head.1} parent=1 // pred_fallthru
      _
    // Predicated region
    $region10: #{_run_mlp_head.1} parent=1 // pred_check
      _
    $region11: #{_run_mlp_head.1} parent=1 // pred_check_branch
      %29 = sbr.rel (0) target = $region13
    $region12: #{_run_mlp_head.1} parent=1 // pred_region
      _
    $region13: #{_run_mlp_head.1} parent=1 // pred_fallthru
      _
    // Predicated region
    $region14: #{_run_mlp_head.1} parent=1 // pred_check
      _
    $region15: #{_run_mlp_head.1} parent=1 // pred_check_branch
      %31 = sbr.rel (0) target = $region17
    $region16: #{_run_mlp_head.1} parent=1 // pred_region
      %s33 = ssub.s32 1024, 1024
      %34 = vsyncadd [#allocation5], %s33
      %s35 = sshll.u32 [#allocation4], 4
      %s36 = int_to_ptr.vmem [resolvable:$true] %s35
      %41 = dma.hbm_to_vmem [thread:$0]  %s3, 1024, %s36, [#allocation5], 64, 64, 4
    $region17: #{_run_mlp_head.1} parent=1 // pred_fallthru
      _
    // Predicated region
    $region18: #{_run_mlp_head.1} parent=1 // pred_check
      _
    $region19: #{_run_mlp_head.1} parent=1 // pred_check_branch
      %43 = sbr.rel (0) target = $region21
    $region20: #{_run_mlp_head.1} parent=1 // pred_region
      _
    $region21: #{_run_mlp_head.1} parent=1 // pred_fallthru
      _
    // Predicated region
    $region22: #{_run_mlp_head.1} parent=1 // pred_check
      _
    $region23: #{_run_mlp_head.1} parent=1 // pred_check_branch
      %45 = sbr.rel (0) target = $region25
    $region24: #{_run_mlp_head.1} parent=1 // pred_region
      %s47 = ssub.s32 1024, 1024
      %48 = vsyncadd [#allocation5], %s47
      %s49 = sshll.u32 [#allocation6], 4
      %s50 = int_to_ptr.vmem [resolvable:$true] %s49
      %55 = dma.hbm_to_vmem [thread:$0]  %s5, 1024, %s50, [#allocation5], 64, 64, 4
    $region25: #{_run_mlp_head.1} parent=1 // pred_fallthru
      _
    // Predicated region
    $region26: #{_run_mlp_head.1} parent=1 // pred_check
      _
    $region27: #{_run_mlp_head.1} parent=1 // pred_check_branch
      %57 = sbr.rel (0) target = $region29
    $region28: #{_run_mlp_head.1} parent=1 // pred_region
      _
    $region29: #{_run_mlp_head.1} parent=1 // pred_fallthru
      _
    // Predicated region
    $region30: #{_run_mlp_head.1} parent=1 // pred_check
      _
    $region31: #{_run_mlp_head.1} parent=1 // pred_check_branch
      %59 = sbr.rel (0) target = $region33
    $region32: #{_run_mlp_head.1} parent=1 // pred_region
      %60 = dma.done [#allocation3], 1024
    $region33: #{_run_mlp_head.1} parent=1 // pred_fallthru
      _
    // Predicated region
    $region34: #{_run_mlp_head.1} parent=1 // pred_check
      _
    $region35: #{_run_mlp_head.1} parent=1 // pred_check_branch
      %62 = sbr.rel (0) target = $region37
    $region36: #{_run_mlp_head.1} parent=1 // pred_region
      %63 = dma.done [#allocation5], 1024
    $region37: #{_run_mlp_head.1} parent=1 // pred_fallthru
      _
    // Predicated region
    $region38: #{_run_mlp_head.1} parent=1 // pred_check
      _
    $region39: #{_run_mlp_head.1} parent=1 // pred_check_branch
      %65 = sbr.rel (0) target = $region41
    $region40: #{_run_mlp_head.1} parent=1 // pred_region
      %66 = dma.done [#allocation5], 1024
    $region41: #{_run_mlp_head.1} parent=1 // pred_fallthru
      _
    %v68 = vld [vmem:[%s0] sm:$0x3]
    %v69 = vld [vmem:[%s0 + $0x2] sm:$0x3]
    %v70 = vld [vmem:[%s0 + $0x4] sm:$0x3]
    %v71 = vld [vmem:[%s0 + $0x6] sm:$0x3]
    %v72 = vld [vmem:[%s0 + $0x8] sm:$0x3]
    %v73 = vld [vmem:[%s0 + $0xa] sm:$0x3]
    %v74 = vld [vmem:[%s0 + $0xc] sm:$0x3]
    %v75 = vld [vmem:[%s0 + $0xe] sm:$0x3]
    %v76 = vld [vmem:[%s0 + $0x10] sm:$0x3]
    %v77 = vld [vmem:[%s0 + $0x12] sm:$0x3]
    %v78 = vld [vmem:[%s0 + $0x14] sm:$0x3]
    %v79 = vld [vmem:[%s0 + $0x16] sm:$0x3]
    %v80 = vld [vmem:[%s0 + $0x18] sm:$0x3]
    %v81 = vld [vmem:[%s0 + $0x1a] sm:$0x3]
    %v82 = vld [vmem:[%s0 + $0x1c] sm:$0x3]
    %v83 = vld [vmem:[%s0 + $0x1e] sm:$0x3]
    %v84 = vld [vmem:[%s0 + $0x20] sm:$0x3]
    %v85 = vld [vmem:[%s0 + $0x22] sm:$0x3]
    %v86 = vld [vmem:[%s0 + $0x24] sm:$0x3]
    %v87 = vld [vmem:[%s0 + $0x26] sm:$0x3]
    %v88 = vld [vmem:[%s0 + $0x28] sm:$0x3]
    %v89 = vld [vmem:[%s0 + $0x2a] sm:$0x3]
    %v90 = vld [vmem:[%s0 + $0x2c] sm:$0x3]
    %v91 = vld [vmem:[%s0 + $0x2e] sm:$0x3]
    %v92 = vld [vmem:[%s0 + $0x30] sm:$0x3]
    %v93 = vld [vmem:[%s0 + $0x32] sm:$0x3]
    %v94 = vld [vmem:[%s0 + $0x34] sm:$0x3]
    %v95 = vld [vmem:[%s0 + $0x36] sm:$0x3]
    %v96 = vld [vmem:[%s0 + $0x38] sm:$0x3]
    %v97 = vld [vmem:[%s0 + $0x3a] sm:$0x3]
    %v98 = vld [vmem:[%s0 + $0x3c] sm:$0x3]
    %v99 = vld [vmem:[%s0 + $0x3e] sm:$0x3]
    %v100 = vld [vmem:[#allocation2] sm:$0xf]
    %v101 = vld [vmem:[#allocation2 + $0x4] sm:$0xf]
    %v102 = vld [vmem:[#allocation2 + $0x8] sm:$0xf]
    %v103 = vld [vmem:[#allocation2 + $0xc] sm:$0xf]
    %v104 = vld [vmem:[#allocation2 + $0x10] sm:$0xf]
    %v105 = vld [vmem:[#allocation2 + $0x14] sm:$0xf]
    %v106 = vld [vmem:[#allocation2 + $0x18] sm:$0xf]
    %v107 = vld [vmem:[#allocation2 + $0x1c] sm:$0xf]
    %v108 = vld [vmem:[#allocation2 + $0x20] sm:$0xf]
    %v109 = vld [vmem:[#allocation2 + $0x24] sm:$0xf]
    %v110 = vld [vmem:[#allocation2 + $0x28] sm:$0xf]
    %v111 = vld [vmem:[#allocation2 + $0x2c] sm:$0xf]
    %v112 = vld [vmem:[#allocation2 + $0x30] sm:$0xf]
    %v113 = vld [vmem:[#allocation2 + $0x34] sm:$0xf]
    %v114 = vld [vmem:[#allocation2 + $0x38] sm:$0xf]
    %v115 = vld [vmem:[#allocation2 + $0x3c] sm:$0xf]
    %v116 = vld [vmem:[%s2] sm:$0x1]
    %v118 = vlaneseq
    %v119 = vshrl.u32 %v118, 7
    %v120 = vsub.s32 0, %v119
    %v121 = vrot.slane %v116, %v120
    %v155 = vcombine.low %v68, %v69
    %v156 = vcombine.low %v70, %v71
    %v158 = vunpack.c.l.s4 1983009808
    %v159 = vunpack.c.0.s8 %v158
    %v160 = vlaneseq
    %v161 = vshrl.u32 %v160, 7
    %v162 = vsub.s32 %v159, %v161
    %v163 = vrot.slane %v155, %v162
    %v165 = vunpack.c.l.s4 1983009808
    %v166 = vunpack.c.0.s8 %v165
    %v167 = vlaneseq
    %v168 = vshrl.u32 %v167, 7
    %v169 = vsub.s32 %v166, %v168
    %v170 = vrot.slane %v156, %v169
    %v171 = vcombine.low %v163, %v170
    %v172 = vcombine.low %v72, %v73
    %v173 = vcombine.low %v74, %v75
    %v175 = vunpack.c.l.s4 1983009808
    %v176 = vunpack.c.0.s8 %v175
    %v177 = vlaneseq
    %v178 = vshrl.u32 %v177, 7
    %v179 = vsub.s32 %v176, %v178
    %v180 = vrot.slane %v172, %v179
    %v182 = vunpack.c.l.s4 1983009808
    %v183 = vunpack.c.0.s8 %v182
    %v184 = vlaneseq
    %v185 = vshrl.u32 %v184, 7
    %v186 = vsub.s32 %v183, %v185
    %v187 = vrot.slane %v173, %v186
    %v188 = vcombine.low %v180, %v187
    %v189 = vcombine.low %v76, %v77
    %v190 = vcombine.low %v78, %v79
    %v192 = vunpack.c.l.s4 1983009808
    %v193 = vunpack.c.0.s8 %v192
    %v194 = vlaneseq
    %v195 = vshrl.u32 %v194, 7
    %v196 = vsub.s32 %v193, %v195
    %v197 = vrot.slane %v189, %v196
    %v199 = vunpack.c.l.s4 1983009808
    %v200 = vunpack.c.0.s8 %v199
    %v201 = vlaneseq
    %v202 = vshrl.u32 %v201, 7
    %v203 = vsub.s32 %v200, %v202
    %v204 = vrot.slane %v190, %v203
    %v205 = vcombine.low %v197, %v204
    %v206 = vcombine.low %v80, %v81
    %v207 = vcombine.low %v82, %v83
    %v209 = vunpack.c.l.s4 1983009808
    %v210 = vunpack.c.0.s8 %v209
    %v211 = vlaneseq
    %v212 = vshrl.u32 %v211, 7
    %v213 = vsub.s32 %v210, %v212
    %v214 = vrot.slane %v206, %v213
    %v216 = vunpack.c.l.s4 1983009808
    %v217 = vunpack.c.0.s8 %v216
    %v218 = vlaneseq
    %v219 = vshrl.u32 %v218, 7
    %v220 = vsub.s32 %v217, %v219
    %v221 = vrot.slane %v207, %v220
    %v222 = vcombine.low %v214, %v221
    %v223 = vcombine.low %v84, %v85
    %v224 = vcombine.low %v86, %v87
    %v226 = vunpack.c.l.s4 1983009808
    %v227 = vunpack.c.0.s8 %v226
    %v228 = vlaneseq
    %v229 = vshrl.u32 %v228, 7
    %v230 = vsub.s32 %v227, %v229
    %v231 = vrot.slane %v223, %v230
    %v233 = vunpack.c.l.s4 1983009808
    %v234 = vunpack.c.0.s8 %v233
    %v235 = vlaneseq
    %v236 = vshrl.u32 %v235, 7
    %v237 = vsub.s32 %v234, %v236
    %v238 = vrot.slane %v224, %v237
    %v239 = vcombine.low %v231, %v238
    %v240 = vcombine.low %v88, %v89
    %v241 = vcombine.low %v90, %v91
    %v243 = vunpack.c.l.s4 1983009808
    %v244 = vunpack.c.0.s8 %v243
    %v245 = vlaneseq
    %v246 = vshrl.u32 %v245, 7
    %v247 = vsub.s32 %v244, %v246
    %v248 = vrot.slane %v240, %v247
    %v250 = vunpack.c.l.s4 1983009808
    %v251 = vunpack.c.0.s8 %v250
    %v252 = vlaneseq
    %v253 = vshrl.u32 %v252, 7
    %v254 = vsub.s32 %v251, %v253
    %v255 = vrot.slane %v241, %v254
    %v256 = vcombine.low %v248, %v255
    %v257 = vcombine.low %v92, %v93
    %v258 = vcombine.low %v94, %v95
    %v260 = vunpack.c.l.s4 1983009808
    %v261 = vunpack.c.0.s8 %v260
    %v262 = vlaneseq
    %v263 = vshrl.u32 %v262, 7
    %v264 = vsub.s32 %v261, %v263
    %v265 = vrot.slane %v257, %v264
    %v267 = vunpack.c.l.s4 1983009808
    %v268 = vunpack.c.0.s8 %v267
    %v269 = vlaneseq
    %v270 = vshrl.u32 %v269, 7
    %v271 = vsub.s32 %v268, %v270
    %v272 = vrot.slane %v258, %v271
    %v273 = vcombine.low %v265, %v272
    %v274 = vcombine.low %v96, %v97
    %v275 = vcombine.low %v98, %v99
    %v277 = vunpack.c.l.s4 1983009808
    %v278 = vunpack.c.0.s8 %v277
    %v279 = vlaneseq
    %v280 = vshrl.u32 %v279, 7
    %v281 = vsub.s32 %v278, %v280
    %v282 = vrot.slane %v274, %v281
    %v284 = vunpack.c.l.s4 1983009808
    %v285 = vunpack.c.0.s8 %v284
    %v286 = vlaneseq
    %v287 = vshrl.u32 %v286, 7
    %v288 = vsub.s32 %v285, %v287
    %v289 = vrot.slane %v275, %v288
    %v290 = vcombine.low %v282, %v289
    %v315 = vunpack.c.l.b16 %v100
    %v316 = vunpack.c.l.b16 %v101
    %v317 = vunpack.c.l.b16 %v102
    %v318 = vunpack.c.l.b16 %v103
    %v319 = vunpack.c.l.b16 %v104
    %v320 = vunpack.c.l.b16 %v105
    %v321 = vunpack.c.l.b16 %v106
    %v322 = vunpack.c.l.b16 %v107
    %v323 = vunpack.c.l.b16 %v108
    %v324 = vunpack.c.l.b16 %v109
    %v325 = vunpack.c.l.b16 %v110
    %v326 = vunpack.c.l.b16 %v111
    %v327 = vunpack.c.l.b16 %v112
    %v328 = vunpack.c.l.b16 %v113
    %v329 = vunpack.c.l.b16 %v114
    %v330 = vunpack.c.l.b16 %v115
    %v331 = vpack.c.b16 %v316, %v315
    %v332 = vpack.c.b16 %v318, %v317
    %v333 = vpack.c.b16 %v320, %v319
    %v334 = vpack.c.b16 %v322, %v321
    %v335 = vpack.c.b16 %v324, %v323
    %v336 = vpack.c.b16 %v326, %v325
    %v337 = vpack.c.b16 %v328, %v327
    %v338 = vpack.c.b16 %v330, %v329
    %347 = vmatprep.subr.bf16.mxu0 0
    %348 = vmatpush1.bf16.msra.mxu0 %v338
    %349 = vmatprep.subr.bf16.mxu0 0
    %350 = vmatpush1.bf16.msra.mxu0 %v337
    %351 = vmatprep.subr.bf16.mxu0 0
    %352 = vmatpush1.bf16.msra.mxu0 %v336
    %353 = vmatprep.subr.bf16.mxu0 0
    %354 = vmatpush1.bf16.msra.mxu0 %v335
    %355 = vmatprep.subr.bf16.mxu0 0
    %356 = vmatpush1.bf16.msra.mxu0 %v334
    %357 = vmatprep.subr.bf16.mxu0 0
    %358 = vmatpush1.bf16.msra.mxu0 %v333
    %359 = vmatprep.subr.bf16.mxu0 0
    %360 = vmatpush1.bf16.msra.mxu0 %v332
    %361 = vmatprep.subr.bf16.mxu0 0
    %362 = vmatpush1.bf16.msra.mxu0 %v331
    %363 = vmatprep.subr.bf16.mxu0 0
    %364 = vmatpush2.bf16.msra.mxu0 0
    %365 = vmatprep.subr.bf16.mxu0 0
    %366 = vmatpush2.bf16.msra.mxu0 0
    %367 = vmatprep.subr.bf16.mxu0 0
    %368 = vmatpush2.bf16.msra.mxu0 0
    %369 = vmatprep.subr.bf16.mxu0 0
    %370 = vmatpush2.bf16.msra.mxu0 0
    %371 = vmatprep.subr.bf16.mxu0 0
    %372 = vmatpush2.bf16.msra.mxu0 0
    %373 = vmatprep.subr.bf16.mxu0 0
    %374 = vmatpush2.bf16.msra.mxu0 0
    %375 = vmatprep.subr.bf16.mxu0 0
    %376 = vmatpush2.bf16.msra.mxu0 0
    %377 = vmatprep.subr.bf16.mxu0 0
    %378 = vmatpush2.bf16.msra.mxu0 0
    %379 = vmatprep.mubr.bf16.mxu0 0
    %380 = vmatmul.mubr.bf16.gmra.mxu0 %v171
    %v381 = vpop.f32.mrf.mxu0
    %v382 = vadd.f32 %v121, %v381
    %v383 = vpop.f32.mrf.mxu0
    %v384 = vpop.f32.mrf.mxu0
    %v385 = vadd.f32 %v121, %v384
    %v386 = vpop.f32.mrf.mxu0
    %387 = vmatprep.mubr.bf16.mxu0 0
    %388 = vmatmul.mubr.bf16.gmra.mxu0 %v188
    %v389 = vpop.f32.mrf.mxu0
    %v390 = vadd.f32 %v121, %v389
    %v391 = vpop.f32.mrf.mxu0
    %v392 = vpop.f32.mrf.mxu0
    %v393 = vadd.f32 %v121, %v392
    %v394 = vpop.f32.mrf.mxu0
    %395 = vmatprep.mubr.bf16.mxu0 0
    %396 = vmatmul.mubr.bf16.gmra.mxu0 %v205
    %v397 = vpop.f32.mrf.mxu0
    %v398 = vadd.f32 %v121, %v397
    %v399 = vpop.f32.mrf.mxu0
    %v400 = vpop.f32.mrf.mxu0
    %v401 = vadd.f32 %v121, %v400
    %v402 = vpop.f32.mrf.mxu0
    %403 = vmatprep.mubr.bf16.mxu0 0
    %404 = vmatmul.mubr.bf16.gmra.mxu0 %v222
    %v405 = vpop.f32.mrf.mxu0
    %v406 = vadd.f32 %v121, %v405
    %v407 = vpop.f32.mrf.mxu0
    %v408 = vpop.f32.mrf.mxu0
    %v409 = vadd.f32 %v121, %v408
    %v410 = vpop.f32.mrf.mxu0
    %411 = vmatprep.mubr.bf16.mxu0 0
    %412 = vmatmul.mubr.bf16.gmra.mxu0 %v239
    %v413 = vpop.f32.mrf.mxu0
    %v414 = vadd.f32 %v121, %v413
    %v415 = vpop.f32.mrf.mxu0
    %v416 = vpop.f32.mrf.mxu0
    %v417 = vadd.f32 %v121, %v416
    %v418 = vpop.f32.mrf.mxu0
    %419 = vmatprep.mubr.bf16.mxu0 0
    %420 = vmatmul.mubr.bf16.gmra.mxu0 %v256
    %v421 = vpop.f32.mrf.mxu0
    %v422 = vadd.f32 %v121, %v421
    %v423 = vpop.f32.mrf.mxu0
    %v424 = vpop.f32.mrf.mxu0
    %v425 = vadd.f32 %v121, %v424
    %v426 = vpop.f32.mrf.mxu0
    %427 = vmatprep.mubr.bf16.mxu0 0
    %428 = vmatmul.mubr.bf16.gmra.mxu0 %v273
    %v429 = vpop.f32.mrf.mxu0
    %v430 = vadd.f32 %v121, %v429
    %v431 = vpop.f32.mrf.mxu0
    %v432 = vpop.f32.mrf.mxu0
    %v433 = vadd.f32 %v121, %v432
    %v434 = vpop.f32.mrf.mxu0
    %435 = vmatprep.mubr.bf16.mxu0 0
    %436 = vmatmul.mubr.bf16.gmra.mxu0 %v290
    %v437 = vpop.f32.mrf.mxu0
    %v438 = vadd.f32 %v121, %v437
    %v439 = vpop.f32.mrf.mxu0
    %v440 = vpop.f32.mrf.mxu0
    %v441 = vadd.f32 %v121, %v440
    %v442 = vpop.f32.mrf.mxu0
    %443 = vdwg.mxu0
    %v444 = vmax.f32 %v382, 0.0
    %v445 = vmax.f32 %v385, 0.0
    %v446 = vmax.f32 %v390, 0.0
    %v447 = vmax.f32 %v393, 0.0
    %v448 = vmax.f32 %v398, 0.0
    %v449 = vmax.f32 %v401, 0.0
    %v450 = vmax.f32 %v406, 0.0
    %v451 = vmax.f32 %v409, 0.0
    %v452 = vmax.f32 %v414, 0.0
    %v453 = vmax.f32 %v417, 0.0
    %v454 = vmax.f32 %v422, 0.0
    %v455 = vmax.f32 %v425, 0.0
    %v456 = vmax.f32 %v430, 0.0
    %v457 = vmax.f32 %v433, 0.0
    %v458 = vmax.f32 %v438, 0.0
    %v459 = vmax.f32 %v441, 0.0
    %v460 = vpack.c.bf16 %v445, %v444
    %v461 = vpack.c.bf16 %v447, %v446
    %v462 = vpack.c.bf16 %v449, %v448
    %v463 = vpack.c.bf16 %v451, %v450
    %v464 = vpack.c.bf16 %v453, %v452
    %v465 = vpack.c.bf16 %v455, %v454
    %v466 = vpack.c.bf16 %v457, %v456
    %v467 = vpack.c.bf16 %v459, %v458
    %v468 = vld [vmem:[#allocation4] sm:$0xf]
    %v469 = vld [vmem:[#allocation4 + $0x4] sm:$0xf]
    %v470 = vld [vmem:[#allocation4 + $0x8] sm:$0xf]
    %v471 = vld [vmem:[#allocation4 + $0xc] sm:$0xf]
    %v472 = vld [vmem:[#allocation4 + $0x10] sm:$0xf]
    %v473 = vld [vmem:[#allocation4 + $0x14] sm:$0xf]
    %v474 = vld [vmem:[#allocation4 + $0x18] sm:$0xf]
    %v475 = vld [vmem:[#allocation4 + $0x1c] sm:$0xf]
    %v476 = vld [vmem:[#allocation4 + $0x20] sm:$0xf]
    %v477 = vld [vmem:[#allocation4 + $0x24] sm:$0xf]
    %v478 = vld [vmem:[#allocation4 + $0x28] sm:$0xf]
    %v479 = vld [vmem:[#allocation4 + $0x2c] sm:$0xf]
    %v480 = vld [vmem:[#allocation4 + $0x30] sm:$0xf]
    %v481 = vld [vmem:[#allocation4 + $0x34] sm:$0xf]
    %v482 = vld [vmem:[#allocation4 + $0x38] sm:$0xf]
    %v483 = vld [vmem:[#allocation4 + $0x3c] sm:$0xf]
    %v484 = vld [vmem:[%s4] sm:$0x1]
    %v486 = vlaneseq
    %v487 = vshrl.u32 %v486, 7
    %v488 = vsub.s32 0, %v487
    %v489 = vrot.slane %v484, %v488
    %v507 = vunpack.c.l.b16 %v468
    %v508 = vunpack.c.l.b16 %v469
    %v509 = vunpack.c.l.b16 %v470
    %v510 = vunpack.c.l.b16 %v471
    %v511 = vunpack.c.l.b16 %v472
    %v512 = vunpack.c.l.b16 %v473
    %v513 = vunpack.c.l.b16 %v474
    %v514 = vunpack.c.l.b16 %v475
    %v515 = vunpack.c.l.b16 %v476
    %v516 = vunpack.c.l.b16 %v477
    %v517 = vunpack.c.l.b16 %v478
    %v518 = vunpack.c.l.b16 %v479
    %v519 = vunpack.c.l.b16 %v480
    %v520 = vunpack.c.l.b16 %v481
    %v521 = vunpack.c.l.b16 %v482
    %v522 = vunpack.c.l.b16 %v483
    %v523 = vpack.c.b16 %v508, %v507
    %v524 = vpack.c.b16 %v510, %v509
    %v525 = vpack.c.b16 %v512, %v511
    %v526 = vpack.c.b16 %v514, %v513
    %v527 = vpack.c.b16 %v516, %v515
    %v528 = vpack.c.b16 %v518, %v517
    %v529 = vpack.c.b16 %v520, %v519
    %v530 = vpack.c.b16 %v522, %v521
    %539 = vmatprep.subr.bf16.mxu0 0
    %540 = vmatpush1.bf16.msra.mxu0 %v530
    %541 = vmatprep.subr.bf16.mxu0 0
    %542 = vmatpush1.bf16.msra.mxu0 %v529
    %543 = vmatprep.subr.bf16.mxu0 0
    %544 = vmatpush1.bf16.msra.mxu0 %v528
    %545 = vmatprep.subr.bf16.mxu0 0
    %546 = vmatpush1.bf16.msra.mxu0 %v527
    %547 = vmatprep.subr.bf16.mxu0 0
    %548 = vmatpush1.bf16.msra.mxu0 %v526
    %549 = vmatprep.subr.bf16.mxu0 0
    %550 = vmatpush1.bf16.msra.mxu0 %v525
    %551 = vmatprep.subr.bf16.mxu0 0
    %552 = vmatpush1.bf16.msra.mxu0 %v524
    %553 = vmatprep.subr.bf16.mxu0 0
    %554 = vmatpush1.bf16.msra.mxu0 %v523
    %555 = vmatprep.subr.bf16.mxu0 0
    %556 = vmatpush2.bf16.msra.mxu0 0
    %557 = vmatprep.subr.bf16.mxu0 0
    %558 = vmatpush2.bf16.msra.mxu0 0
    %559 = vmatprep.subr.bf16.mxu0 0
    %560 = vmatpush2.bf16.msra.mxu0 0
    %561 = vmatprep.subr.bf16.mxu0 0
    %562 = vmatpush2.bf16.msra.mxu0 0
    %563 = vmatprep.subr.bf16.mxu0 0
    %564 = vmatpush2.bf16.msra.mxu0 0
    %565 = vmatprep.subr.bf16.mxu0 0
    %566 = vmatpush2.bf16.msra.mxu0 0
    %567 = vmatprep.subr.bf16.mxu0 0
    %568 = vmatpush2.bf16.msra.mxu0 0
    %569 = vmatprep.subr.bf16.mxu0 0
    %570 = vmatpush2.bf16.msra.mxu0 0
    %571 = vmatprep.mubr.bf16.mxu0 0
    %572 = vmatmul.mubr.bf16.gmra.mxu0 %v460
    %v573 = vpop.f32.mrf.mxu0
    %v574 = vadd.f32 %v489, %v573
    %v575 = vpop.f32.mrf.mxu0
    %v576 = vpop.f32.mrf.mxu0
    %v577 = vadd.f32 %v489, %v576
    %v578 = vpop.f32.mrf.mxu0
    %579 = vmatprep.mubr.bf16.mxu0 0
    %580 = vmatmul.mubr.bf16.gmra.mxu0 %v461
    %v581 = vpop.f32.mrf.mxu0
    %v582 = vadd.f32 %v489, %v581
    %v583 = vpop.f32.mrf.mxu0
    %v584 = vpop.f32.mrf.mxu0
    %v585 = vadd.f32 %v489, %v584
    %v586 = vpop.f32.mrf.mxu0
    %587 = vmatprep.mubr.bf16.mxu0 0
    %588 = vmatmul.mubr.bf16.gmra.mxu0 %v462
    %v589 = vpop.f32.mrf.mxu0
    %v590 = vadd.f32 %v489, %v589
    %v591 = vpop.f32.mrf.mxu0
    %v592 = vpop.f32.mrf.mxu0
    %v593 = vadd.f32 %v489, %v592
    %v594 = vpop.f32.mrf.mxu0
    %595 = vmatprep.mubr.bf16.mxu0 0
    %596 = vmatmul.mubr.bf16.gmra.mxu0 %v463
    %v597 = vpop.f32.mrf.mxu0
    %v598 = vadd.f32 %v489, %v597
    %v599 = vpop.f32.mrf.mxu0
    %v600 = vpop.f32.mrf.mxu0
    %v601 = vadd.f32 %v489, %v600
    %v602 = vpop.f32.mrf.mxu0
    %603 = vmatprep.mubr.bf16.mxu0 0
    %604 = vmatmul.mubr.bf16.gmra.mxu0 %v464
    %v605 = vpop.f32.mrf.mxu0
    %v606 = vadd.f32 %v489, %v605
    %v607 = vpop.f32.mrf.mxu0
    %v608 = vpop.f32.mrf.mxu0
    %v609 = vadd.f32 %v489, %v608
    %v610 = vpop.f32.mrf.mxu0
    %611 = vmatprep.mubr.bf16.mxu0 0
    %612 = vmatmul.mubr.bf16.gmra.mxu0 %v465
    %v613 = vpop.f32.mrf.mxu0
    %v614 = vadd.f32 %v489, %v613
    %v615 = vpop.f32.mrf.mxu0
    %v616 = vpop.f32.mrf.mxu0
    %v617 = vadd.f32 %v489, %v616
    %v618 = vpop.f32.mrf.mxu0
    %619 = vmatprep.mubr.bf16.mxu0 0
    %620 = vmatmul.mubr.bf16.gmra.mxu0 %v466
    %v621 = vpop.f32.mrf.mxu0
    %v622 = vadd.f32 %v489, %v621
    %v623 = vpop.f32.mrf.mxu0
    %v624 = vpop.f32.mrf.mxu0
    %v625 = vadd.f32 %v489, %v624
    %v626 = vpop.f32.mrf.mxu0
    %627 = vmatprep.mubr.bf16.mxu0 0
    %628 = vmatmul.mubr.bf16.gmra.mxu0 %v467
    %v629 = vpop.f32.mrf.mxu0
    %v630 = vadd.f32 %v489, %v629
    %v631 = vpop.f32.mrf.mxu0
    %v632 = vpop.f32.mrf.mxu0
    %v633 = vadd.f32 %v489, %v632
    %v634 = vpop.f32.mrf.mxu0
    %635 = vdwg.mxu0
    %v636 = vmax.f32 %v574, 0.0
    %v637 = vmax.f32 %v577, 0.0
    %v638 = vmax.f32 %v582, 0.0
    %v639 = vmax.f32 %v585, 0.0
    %v640 = vmax.f32 %v590, 0.0
    %v641 = vmax.f32 %v593, 0.0
    %v642 = vmax.f32 %v598, 0.0
    %v643 = vmax.f32 %v601, 0.0
    %v644 = vmax.f32 %v606, 0.0
    %v645 = vmax.f32 %v609, 0.0
    %v646 = vmax.f32 %v614, 0.0
    %v647 = vmax.f32 %v617, 0.0
    %v648 = vmax.f32 %v622, 0.0
    %v649 = vmax.f32 %v625, 0.0
    %v650 = vmax.f32 %v630, 0.0
    %v651 = vmax.f32 %v633, 0.0
    %v652 = vpack.c.bf16 %v637, %v636
    %v653 = vpack.c.bf16 %v639, %v638
    %v654 = vpack.c.bf16 %v641, %v640
    %v655 = vpack.c.bf16 %v643, %v642
    %v656 = vpack.c.bf16 %v645, %v644
    %v657 = vpack.c.bf16 %v647, %v646
    %v658 = vpack.c.bf16 %v649, %v648
    %v659 = vpack.c.bf16 %v651, %v650
    %v660 = vld [vmem:[#allocation6] sm:$0xf]
    %v661 = vld [vmem:[#allocation6 + $0x4] sm:$0xf]
    %v662 = vld [vmem:[#allocation6 + $0x8] sm:$0xf]
    %v663 = vld [vmem:[#allocation6 + $0xc] sm:$0xf]
    %v664 = vld [vmem:[#allocation6 + $0x10] sm:$0xf]
    %v665 = vld [vmem:[#allocation6 + $0x14] sm:$0xf]
    %v666 = vld [vmem:[#allocation6 + $0x18] sm:$0xf]
    %v667 = vld [vmem:[#allocation6 + $0x1c] sm:$0xf]
    %v668 = vld [vmem:[#allocation6 + $0x20] sm:$0xf]
    %v669 = vld [vmem:[#allocation6 + $0x24] sm:$0xf]
    %v670 = vld [vmem:[#allocation6 + $0x28] sm:$0xf]
    %v671 = vld [vmem:[#allocation6 + $0x2c] sm:$0xf]
    %v672 = vld [vmem:[#allocation6 + $0x30] sm:$0xf]
    %v673 = vld [vmem:[#allocation6 + $0x34] sm:$0xf]
    %v674 = vld [vmem:[#allocation6 + $0x38] sm:$0xf]
    %v675 = vld [vmem:[#allocation6 + $0x3c] sm:$0xf]
    %v676 = vld [vmem:[%s6] sm:$0x1]
    %v678 = vlaneseq
    %v679 = vshrl.u32 %v678, 7
    %v680 = vsub.s32 0, %v679
    %v681 = vrot.slane %v676, %v680
    %v699 = vunpack.c.l.b16 %v660
    %v700 = vunpack.c.l.b16 %v661
    %v701 = vunpack.c.l.b16 %v662
    %v702 = vunpack.c.l.b16 %v663
    %v703 = vunpack.c.l.b16 %v664
    %v704 = vunpack.c.l.b16 %v665
    %v705 = vunpack.c.l.b16 %v666
    %v706 = vunpack.c.l.b16 %v667
    %v707 = vunpack.c.l.b16 %v668
    %v708 = vunpack.c.l.b16 %v669
    %v709 = vunpack.c.l.b16 %v670
    %v710 = vunpack.c.l.b16 %v671
    %v711 = vunpack.c.l.b16 %v672
    %v712 = vunpack.c.l.b16 %v673
    %v713 = vunpack.c.l.b16 %v674
    %v714 = vunpack.c.l.b16 %v675
    %v715 = vpack.c.b16 %v700, %v699
    %v716 = vpack.c.b16 %v702, %v701
    %v717 = vpack.c.b16 %v704, %v703
    %v718 = vpack.c.b16 %v706, %v705
    %v719 = vpack.c.b16 %v708, %v707
    %v720 = vpack.c.b16 %v710, %v709
    %v721 = vpack.c.b16 %v712, %v711
    %v722 = vpack.c.b16 %v714, %v713
    %731 = vmatprep.subr.bf16.mxu0 0
    %732 = vmatpush1.bf16.msra.mxu0 %v722
    %733 = vmatprep.subr.bf16.mxu0 0
    %734 = vmatpush1.bf16.msra.mxu0 %v721
    %735 = vmatprep.subr.bf16.mxu0 0
    %736 = vmatpush1.bf16.msra.mxu0 %v720
    %737 = vmatprep.subr.bf16.mxu0 0
    %738 = vmatpush1.bf16.msra.mxu0 %v719
    %739 = vmatprep.subr.bf16.mxu0 0
    %740 = vmatpush1.bf16.msra.mxu0 %v718
    %741 = vmatprep.subr.bf16.mxu0 0
    %742 = vmatpush1.bf16.msra.mxu0 %v717
    %743 = vmatprep.subr.bf16.mxu0 0
    %744 = vmatpush1.bf16.msra.mxu0 %v716
    %745 = vmatprep.subr.bf16.mxu0 0
    %746 = vmatpush1.bf16.msra.mxu0 %v715
    %747 = vmatprep.subr.bf16.mxu0 0
    %748 = vmatpush2.bf16.msra.mxu0 0
    %749 = vmatprep.subr.bf16.mxu0 0
    %750 = vmatpush2.bf16.msra.mxu0 0
    %751 = vmatprep.subr.bf16.mxu0 0
    %752 = vmatpush2.bf16.msra.mxu0 0
    %753 = vmatprep.subr.bf16.mxu0 0
    %754 = vmatpush2.bf16.msra.mxu0 0
    %755 = vmatprep.subr.bf16.mxu0 0
    %756 = vmatpush2.bf16.msra.mxu0 0
    %757 = vmatprep.subr.bf16.mxu0 0
    %758 = vmatpush2.bf16.msra.mxu0 0
    %759 = vmatprep.subr.bf16.mxu0 0
    %760 = vmatpush2.bf16.msra.mxu0 0
    %761 = vmatprep.subr.bf16.mxu0 0
    %762 = vmatpush2.bf16.msra.mxu0 0
    %763 = vmatprep.mubr.bf16.mxu0 0
    %764 = vmatmul.mubr.bf16.gmra.mxu0 %v652
    %v765 = vpop.f32.mrf.mxu0
    %v766 = vadd.f32 %v681, %v765
    %v767 = vpop.f32.mrf.mxu0
    %v768 = vpop.f32.mrf.mxu0
    %v769 = vadd.f32 %v681, %v768
    %v770 = vpop.f32.mrf.mxu0
    %771 = vmatprep.mubr.bf16.mxu0 0
    %772 = vmatmul.mubr.bf16.gmra.mxu0 %v653
    %v773 = vpop.f32.mrf.mxu0
    %v774 = vadd.f32 %v681, %v773
    %v775 = vpop.f32.mrf.mxu0
    %v776 = vpop.f32.mrf.mxu0
    %v777 = vadd.f32 %v681, %v776
    %v778 = vpop.f32.mrf.mxu0
    %779 = vmatprep.mubr.bf16.mxu0 0
    %780 = vmatmul.mubr.bf16.gmra.mxu0 %v654
    %v781 = vpop.f32.mrf.mxu0
    %v782 = vadd.f32 %v681, %v781
    %v783 = vpop.f32.mrf.mxu0
    %v784 = vpop.f32.mrf.mxu0
    %v785 = vadd.f32 %v681, %v784
    %v786 = vpop.f32.mrf.mxu0
    %787 = vmatprep.mubr.bf16.mxu0 0
    %788 = vmatmul.mubr.bf16.gmra.mxu0 %v655
    %v789 = vpop.f32.mrf.mxu0
    %v790 = vadd.f32 %v681, %v789
    %v791 = vpop.f32.mrf.mxu0
    %v792 = vpop.f32.mrf.mxu0
    %v793 = vadd.f32 %v681, %v792
    %v794 = vpop.f32.mrf.mxu0
    %795 = vmatprep.mubr.bf16.mxu0 0
    %796 = vmatmul.mubr.bf16.gmra.mxu0 %v656
    %v797 = vpop.f32.mrf.mxu0
    %v798 = vadd.f32 %v681, %v797
    %v799 = vpop.f32.mrf.mxu0
    %v800 = vpop.f32.mrf.mxu0
    %v801 = vadd.f32 %v681, %v800
    %v802 = vpop.f32.mrf.mxu0
    %803 = vmatprep.mubr.bf16.mxu0 0
    %804 = vmatmul.mubr.bf16.gmra.mxu0 %v657
    %v805 = vpop.f32.mrf.mxu0
    %v806 = vadd.f32 %v681, %v805
    %v807 = vpop.f32.mrf.mxu0
    %v808 = vpop.f32.mrf.mxu0
    %v809 = vadd.f32 %v681, %v808
    %v810 = vpop.f32.mrf.mxu0
    %811 = vmatprep.mubr.bf16.mxu0 0
    %812 = vmatmul.mubr.bf16.gmra.mxu0 %v658
    %v813 = vpop.f32.mrf.mxu0
    %v814 = vadd.f32 %v681, %v813
    %v815 = vpop.f32.mrf.mxu0
    %v816 = vpop.f32.mrf.mxu0
    %v817 = vadd.f32 %v681, %v816
    %v818 = vpop.f32.mrf.mxu0
    %819 = vmatprep.mubr.bf16.mxu0 0
    %820 = vmatmul.mubr.bf16.gmra.mxu0 %v659
    %v821 = vpop.f32.mrf.mxu0
    %v822 = vadd.f32 %v681, %v821
    %v823 = vpop.f32.mrf.mxu0
    %v824 = vpop.f32.mrf.mxu0
    %v825 = vadd.f32 %v681, %v824
    %v826 = vpop.f32.mrf.mxu0
    %827 = vdwg.mxu0
    %v828 = vpack.c.bf16 %v769, %v766
    %v829 = vpack.c.bf16 %v777, %v774
    %v830 = vpack.c.bf16 %v785, %v782
    %v831 = vpack.c.bf16 %v793, %v790
    %v832 = vpack.c.bf16 %v801, %v798
    %v833 = vpack.c.bf16 %v809, %v806
    %v834 = vpack.c.bf16 %v817, %v814
    %v835 = vpack.c.bf16 %v825, %v822
    %v844 = vcombine.high %v828, %v828
    %v846 = vunpack.c.l.s4 1983009808
    %v847 = vunpack.c.0.s8 %v846
    %v848 = vlaneseq
    %v849 = vshrl.u32 %v848, 7
    %v850 = vsub.s32 %v847, %v849
    %v851 = vrot.slane %v828, %v850
    %v853 = vunpack.c.l.s4 1983009808
    %v854 = vunpack.c.0.s8 %v853
    %v855 = vlaneseq
    %v856 = vshrl.u32 %v855, 7
    %v857 = vsub.s32 %v854, %v856
    %v858 = vrot.slane %v844, %v857
    %v859 = vcombine.high %v851, %v851
    %v860 = vcombine.high %v858, %v858
    %v861 = vcombine.high %v829, %v829
    %v863 = vunpack.c.l.s4 1983009808
    %v864 = vunpack.c.0.s8 %v863
    %v865 = vlaneseq
    %v866 = vshrl.u32 %v865, 7
    %v867 = vsub.s32 %v864, %v866
    %v868 = vrot.slane %v829, %v867
    %v870 = vunpack.c.l.s4 1983009808
    %v871 = vunpack.c.0.s8 %v870
    %v872 = vlaneseq
    %v873 = vshrl.u32 %v872, 7
    %v874 = vsub.s32 %v871, %v873
    %v875 = vrot.slane %v861, %v874
    %v876 = vcombine.high %v868, %v868
    %v877 = vcombine.high %v875, %v875
    %v878 = vcombine.high %v830, %v830
    %v880 = vunpack.c.l.s4 1983009808
    %v881 = vunpack.c.0.s8 %v880
    %v882 = vlaneseq
    %v883 = vshrl.u32 %v882, 7
    %v884 = vsub.s32 %v881, %v883
    %v885 = vrot.slane %v830, %v884
    %v887 = vunpack.c.l.s4 1983009808
    %v888 = vunpack.c.0.s8 %v887
    %v889 = vlaneseq
    %v890 = vshrl.u32 %v889, 7
    %v891 = vsub.s32 %v888, %v890
    %v892 = vrot.slane %v878, %v891
    %v893 = vcombine.high %v885, %v885
    %v894 = vcombine.high %v892, %v892
    %v895 = vcombine.high %v831, %v831
    %v897 = vunpack.c.l.s4 1983009808
    %v898 = vunpack.c.0.s8 %v897
    %v899 = vlaneseq
    %v900 = vshrl.u32 %v899, 7
    %v901 = vsub.s32 %v898, %v900
    %v902 = vrot.slane %v831, %v901
    %v904 = vunpack.c.l.s4 1983009808
    %v905 = vunpack.c.0.s8 %v904
    %v906 = vlaneseq
    %v907 = vshrl.u32 %v906, 7
    %v908 = vsub.s32 %v905, %v907
    %v909 = vrot.slane %v895, %v908
    %v910 = vcombine.high %v902, %v902
    %v911 = vcombine.high %v909, %v909
    %v912 = vcombine.high %v832, %v832
    %v914 = vunpack.c.l.s4 1983009808
    %v915 = vunpack.c.0.s8 %v914
    %v916 = vlaneseq
    %v917 = vshrl.u32 %v916, 7
    %v918 = vsub.s32 %v915, %v917
    %v919 = vrot.slane %v832, %v918
    %v921 = vunpack.c.l.s4 1983009808
    %v922 = vunpack.c.0.s8 %v921
    %v923 = vlaneseq
    %v924 = vshrl.u32 %v923, 7
    %v925 = vsub.s32 %v922, %v924
    %v926 = vrot.slane %v912, %v925
    %v927 = vcombine.high %v919, %v919
    %v928 = vcombine.high %v926, %v926
    %v929 = vcombine.high %v833, %v833
    %v931 = vunpack.c.l.s4 1983009808
    %v932 = vunpack.c.0.s8 %v931
    %v933 = vlaneseq
    %v934 = vshrl.u32 %v933, 7
    %v935 = vsub.s32 %v932, %v934
    %v936 = vrot.slane %v833, %v935
    %v938 = vunpack.c.l.s4 1983009808
    %v939 = vunpack.c.0.s8 %v938
    %v940 = vlaneseq
    %v941 = vshrl.u32 %v940, 7
    %v942 = vsub.s32 %v939, %v941
    %v943 = vrot.slane %v929, %v942
    %v944 = vcombine.high %v936, %v936
    %v945 = vcombine.high %v943, %v943
    %v946 = vcombine.high %v834, %v834
    %v948 = vunpack.c.l.s4 1983009808
    %v949 = vunpack.c.0.s8 %v948
    %v950 = vlaneseq
    %v951 = vshrl.u32 %v950, 7
    %v952 = vsub.s32 %v949, %v951
    %v953 = vrot.slane %v834, %v952
    %v955 = vunpack.c.l.s4 1983009808
    %v956 = vunpack.c.0.s8 %v955
    %v957 = vlaneseq
    %v958 = vshrl.u32 %v957, 7
    %v959 = vsub.s32 %v956, %v958
    %v960 = vrot.slane %v946, %v959
    %v961 = vcombine.high %v953, %v953
    %v962 = vcombine.high %v960, %v960
    %v963 = vcombine.high %v835, %v835
    %v965 = vunpack.c.l.s4 1983009808
    %v966 = vunpack.c.0.s8 %v965
    %v967 = vlaneseq
    %v968 = vshrl.u32 %v967, 7
    %v969 = vsub.s32 %v966, %v968
    %v970 = vrot.slane %v835, %v969
    %v972 = vunpack.c.l.s4 1983009808
    %v973 = vunpack.c.0.s8 %v972
    %v974 = vlaneseq
    %v975 = vshrl.u32 %v974, 7
    %v976 = vsub.s32 %v973, %v975
    %v977 = vrot.slane %v963, %v976
    %v978 = vcombine.high %v970, %v970
    %v979 = vcombine.high %v977, %v977
    %1012 = vst [vmem:[#allocation7] sm:$0x3] %v851
    %1013 = vst [vmem:[#allocation7 + $0x2] sm:$0x3] %v859
    %1014 = vst [vmem:[#allocation7 + $0x4] sm:$0x3] %v858
    %1015 = vst [vmem:[#allocation7 + $0x6] sm:$0x3] %v860
    %1016 = vst [vmem:[#allocation7 + $0x8] sm:$0x3] %v868
    %1017 = vst [vmem:[#allocation7 + $0xa] sm:$0x3] %v876
    %1018 = vst [vmem:[#allocation7 + $0xc] sm:$0x3] %v875
    %1019 = vst [vmem:[#allocation7 + $0xe] sm:$0x3] %v877
    %1020 = vst [vmem:[#allocation7 + $0x10] sm:$0x3] %v885
    %1021 = vst [vmem:[#allocation7 + $0x12] sm:$0x3] %v893
    %1022 = vst [vmem:[#allocation7 + $0x14] sm:$0x3] %v892
    %1023 = vst [vmem:[#allocation7 + $0x16] sm:$0x3] %v894
    %1024 = vst [vmem:[#allocation7 + $0x18] sm:$0x3] %v902
    %1025 = vst [vmem:[#allocation7 + $0x1a] sm:$0x3] %v910
    %1026 = vst [vmem:[#allocation7 + $0x1c] sm:$0x3] %v909
    %1027 = vst [vmem:[#allocation7 + $0x1e] sm:$0x3] %v911
    %1028 = vst [vmem:[#allocation7 + $0x20] sm:$0x3] %v919
    %1029 = vst [vmem:[#allocation7 + $0x22] sm:$0x3] %v927
    %1030 = vst [vmem:[#allocation7 + $0x24] sm:$0x3] %v926
    %1031 = vst [vmem:[#allocation7 + $0x26] sm:$0x3] %v928
    %1032 = vst [vmem:[#allocation7 + $0x28] sm:$0x3] %v936
    %1033 = vst [vmem:[#allocation7 + $0x2a] sm:$0x3] %v944
    %1034 = vst [vmem:[#allocation7 + $0x2c] sm:$0x3] %v943
    %1035 = vst [vmem:[#allocation7 + $0x2e] sm:$0x3] %v945
    %1036 = vst [vmem:[#allocation7 + $0x30] sm:$0x3] %v953
    %1037 = vst [vmem:[#allocation7 + $0x32] sm:$0x3] %v961
    %1038 = vst [vmem:[#allocation7 + $0x34] sm:$0x3] %v960
    %1039 = vst [vmem:[#allocation7 + $0x36] sm:$0x3] %v962
    %1040 = vst [vmem:[#allocation7 + $0x38] sm:$0x3] %v970
    %1041 = vst [vmem:[#allocation7 + $0x3a] sm:$0x3] %v978
    %1042 = vst [vmem:[#allocation7 + $0x3c] sm:$0x3] %v977
    %1043 = vst [vmem:[#allocation7 + $0x3e] sm:$0x3] %v979
    // Predicated region
    $region42: #{_run_mlp_head.1} parent=1 // pred_check
      _
    $region43: #{_run_mlp_head.1} parent=1 // pred_check_branch
      %1045 = sbr.rel (0) target = $region45
    $region44: #{_run_mlp_head.1} parent=1 // pred_region
      // Predicated region
      $region46: #{_run_mlp_head.1} parent=44 // pred_check
        _
      $region47: #{_run_mlp_head.1} parent=44 // pred_check_branch
        %1047 = sbr.rel (0) target = $region49
      $region48: #{_run_mlp_head.1} parent=44 // pred_region
        // Predicated region
        $region50: #{_run_mlp_head.1} parent=48 // pred_check
          _
        $region51: #{_run_mlp_head.1} parent=48 // pred_check_branch
          %1049 = sbr.rel target = $region53
        $region52: #{_run_mlp_head.1} parent=48 // pred_region
          // Predicated region
          $region65: #{_run_mlp_head.1} parent=52 // pred_check
            _
          $region66: #{_run_mlp_head.1} parent=52 // pred_check_branch
            %1065 = sbr.rel (0) target = $region68
          $region67: #{_run_mlp_head.1} parent=52 // pred_region
            %s1067 = ssub.s32 4, 1
            loop: start=0, step=1, limit=1
            $region69: #{_run_mlp_head.1} parent=67 // loop_pre_header
              _
            $region70: #{_run_mlp_head.1} parent=67 // loop_header
              %s1069 = sphi 0, %s1073
              %p1070 = scmp.ge.s32.totalorder %s1069, 1
              %s1074 = sphi [#allocation7], [#allocation7]
              %s1075 = sphi %s7, %s7
            $region71: #{_run_mlp_head.1} parent=67 // loop_header_branch
              %1072 = sbr.rel (%p1070) target = $region75
            $region72: #{_run_mlp_head.1} parent=67 // loop_body
              %v1076 = vld [vmem:[%s1074] sm:%s1067]
              %1077 = vst [vmem:[%s1075] sm:%s1067] %v1076
            $region73: #{_run_mlp_head.1} parent=67 // loop_footer
              %s1073 = sadd.s32 1, %s1069
            $region74: #{_run_mlp_head.1} parent=67 // loop_footer_branch
              %1068 = sbr.rel target = $region70
            $region75: #{_run_mlp_head.1} parent=67 // loop_exit
              _
          $region68: #{_run_mlp_head.1} parent=52 // pred_fallthru
            _
        $region53: #{_run_mlp_head.1} parent=48 // pred_fallthru
          _
        // Predicated region
        $region54: #{_run_mlp_head.1} parent=48 // pred_check
          _
        $region55: #{_run_mlp_head.1} parent=48 // pred_check_branch
          %1051 = sbr.rel (0) target = $region57
        $region56: #{_run_mlp_head.1} parent=48 // pred_region
          %s1053 = ssub.s32 4, 1
          loop: start=0, step=1, limit=1
          $region58: #{_run_mlp_head.1} parent=56 // loop_pre_header
            _
          $region59: #{_run_mlp_head.1} parent=56 // loop_header
            %s1055 = sphi 0, %s1059
            %p1056 = scmp.ge.s32.totalorder %s1055, 1
            %s1060 = sphi [#allocation7], [#allocation7]
            %s1061 = sphi %s7, %s7
          $region60: #{_run_mlp_head.1} parent=56 // loop_header_branch
            %1058 = sbr.rel (%p1056) target = $region64
          $region61: #{_run_mlp_head.1} parent=56 // loop_body
            %v1062 = vld [vmem:[%s1060] sm:%s1053]
            %1063 = vst [vmem:[%s1061] sm:%s1053] %v1062
          $region62: #{_run_mlp_head.1} parent=56 // loop_footer
            %s1059 = sadd.s32 1, %s1055
          $region63: #{_run_mlp_head.1} parent=56 // loop_footer_branch
            %1054 = sbr.rel target = $region59
          $region64: #{_run_mlp_head.1} parent=56 // loop_exit
            _
        $region57: #{_run_mlp_head.1} parent=48 // pred_fallthru
          _
      $region49: #{_run_mlp_head.1} parent=44 // pred_fallthru
        _
      %1078 = vnop
    $region45: #{_run_mlp_head.1} parent=1 // pred_fallthru
      _
    // Predicated region
    $region76: #{_run_mlp_head.1} parent=1 // pred_check
      _
    $region77: #{_run_mlp_head.1} parent=1 // pred_check_branch
      %1080 = sbr.rel (0) target = $region79
    $region78: #{_run_mlp_head.1} parent=1 // pred_region
      _
    $region79: #{_run_mlp_head.1} parent=1 // pred_fallthru
      _
    %1081 = vsyncpa [#allocation3], 1
    %1082 = vsyncpa [#allocation5], 1

</llo_original>
